<compile_context>
chip_gen: v6e
topology: v6e:2x2x1
jax: 0.10.0
libtpu: 0.0.40
codegen_flags: <defaults>
</compile_context>

<pallas_src>
import jax
import jax.numpy as jnp
from jax.experimental import pallas as pl
from jax.experimental.pallas import tpu as pltpu

IN_FEATURES = 10
OUT_FEATURES = 5
PACK = 64                          # samples packed per row
PACKED_IN = PACK * IN_FEATURES     # 640  (multiple of 128 -> lane dense)
PACKED_OUT = PACK * OUT_FEATURES   # 320  (multiple of 128 -> lane dense)
MAX_TILE_ROWS = 256                # packed rows per grid step (= 16384 samples)


def _round_up(n, m):
    return ((n + m - 1) // m) * m


def linear_kernel(xp_ref, wd_ref, b_ref, o_ref):
    # xp_ref: (T, 640)  wd_ref: (640, 320)  b_ref: (1, 320)  o_ref: (T, 320)
    acc = jnp.dot(xp_ref[...], wd_ref[...], preferred_element_type=jnp.float32)
    o_ref[...] = (acc + b_ref[...]).astype(o_ref.dtype)


def prepare_params(weight, bias):
    """One-time prep: PyTorch (OUT, IN) weight -> block-diag (640, 320); bias -> (1, 320)."""
    wt = weight.T.astype(jnp.float32)                      # (IN, OUT)
    w_diag = jnp.kron(jnp.eye(PACK, dtype=wt.dtype), wt)   # (640, 320) block-diagonal
    b_packed = jnp.tile(bias.astype(jnp.float32), PACK).reshape(1, PACKED_OUT)
    return w_diag, b_packed


def _pick_tile(n_rows):
    """Packed-row tile: multiple of 8 (or full extent), capped, >=2 grid steps when possible."""
    if n_rows <= 16:
        return n_rows                         # full-extent block (always legal)
    half = _round_up(-(-n_rows // 2), 8)      # ~2 grid steps -> both v7x cores
    return min(MAX_TILE_ROWS, half)


@jax.jit
def linear_forward(x, w_diag, b_packed):
    """y = x @ W.T + b, matching torch.nn.Linear(10, 5) forward semantics.

    x        : (B, 10)   float32
    w_diag   : (640, 320) float32  (block-diag weight from prepare_params)
    b_packed : (1, 320)  float32
    """
    B = x.shape[0]
    b_pad = _round_up(B, PACK)
    if b_pad != B:
        # Only the ragged case pads, and only up to PACK-1 = 63 rows.
        x = jnp.pad(x, ((0, b_pad - B), (0, 0)))
    n_rows = b_pad // PACK
    xp = x.reshape(n_rows, PACKED_IN)         # free bitcast when no pad happened

    tile = _pick_tile(n_rows)
    grid = (pl.cdiv(n_rows, tile),)           # ragged last block: stores masked

    itemsize = x.dtype.itemsize
    bytes_accessed = (
        n_rows * PACKED_IN * itemsize          # packed x
        + PACKED_IN * PACKED_OUT * itemsize    # block-diag weight (resident)
        + PACKED_OUT * itemsize                # bias
        + n_rows * PACKED_OUT * itemsize       # packed out
    )

    yp = pl.pallas_call(
        linear_kernel,
        out_shape=jax.ShapeDtypeStruct((n_rows, PACKED_OUT), x.dtype),
        grid_spec=pl.GridSpec(
            grid=grid,
            in_specs=[
                # packed x tiles march down the packed-batch axis ...
                pl.BlockSpec((tile, PACKED_IN), lambda i: (i, 0)),
                # ... weight / bias stay VMEM-resident (same block every step)
                pl.BlockSpec((PACKED_IN, PACKED_OUT), lambda i: (0, 0)),
                pl.BlockSpec((1, PACKED_OUT), lambda i: (0, 0)),
            ],
            out_specs=pl.BlockSpec((tile, PACKED_OUT), lambda i: (i, 0)),
        ),
        compiler_params=pltpu.CompilerParams(
            # Batch tiles are independent -> shard across both v7x TensorCores.
            dimension_semantics=("parallel",),
        ),
        cost_estimate=pl.CostEstimate(
            flops=2 * n_rows * PACKED_IN * PACKED_OUT,
            transcendentals=0,
            bytes_accessed=bytes_accessed,
        ),
    )(xp, w_diag, b_packed)

    y = yp.reshape(b_pad, OUT_FEATURES)        # free bitcast back to (B_pad, 5)
    return y[:B] if b_pad != B else y


if __name__ == "__main__":
    key = jax.random.PRNGKey(0)
    k_x1, k_x2, k_x3, k_x4, k_w, k_b = jax.random.split(key, 6)

    # Deterministic param init mirroring nn.Linear's uniform(-1/sqrt(in), 1/sqrt(in)).
    bound = 1.0 / (IN_FEATURES ** 0.5)
    weight = jax.random.uniform(
        k_w, (OUT_FEATURES, IN_FEATURES), jnp.float32, -bound, bound)
    bias = jax.random.uniform(
        k_b, (OUT_FEATURES,), jnp.float32, -bound, bound)

    # Params prepared once (transpose / block-diag expansion hoisted off the call path).
    w_diag, b_packed = prepare_params(weight, bias)

    # B=2, 13: tail-pad path.  B=1024: pad-free bitcast-reshape path.
    # B=2055: multi-step grid + ragged (masked) last block.
    for B, kx in ((2, k_x1), (13, k_x2), (1024, k_x3), (2055, k_x4)):
        x = jax.random.normal(kx, (B, IN_FEATURES), jnp.float32)
        y = jax.block_until_ready(linear_forward(x, w_diag, b_packed))
        y_ref = jnp.dot(x, weight.T, precision=jax.lax.Precision.HIGHEST) + bias
        assert y.shape == (B, OUT_FEATURES)
        assert jnp.allclose(y, y_ref, atol=1e-5, rtol=1e-5), (
            B, float(jnp.abs(y - y_ref).max()))

    print("KERNEL_OK")
</pallas_src>

<mosaic_0001>
module attributes {stable_mosaic.version = 11 : i64} {
  func.func @linear_kernel(%arg0: i32, %arg1: memref<1x640xf32, #tpu.memory_space<vmem>>, %arg2: memref<640x320xf32, #tpu.memory_space<vmem>>, %arg3: memref<1x320xf32, #tpu.memory_space<vmem>>, %arg4: memref<1x320xf32, #tpu.memory_space<vmem>>) attributes {dimension_semantics = [#tpu.dimension_semantics<parallel>], iteration_bounds = array<i64: 1>, scalar_prefetch = 0 : i64, scratch_operands = 0 : i64, tpu.core_type = #tpu.core_type<tc>, window_params = [{transform_indices = @transform_0, window_bounds = array<i64: 1, 640>}, {pipeline_mode = #tpu.pipeline_mode<synchronous>, transform_indices = @transform_1, window_bounds = array<i64: 640, 320>}, {pipeline_mode = #tpu.pipeline_mode<synchronous>, transform_indices = @transform_2, window_bounds = array<i64: 1, 320>}, {transform_indices = @transform_3, window_bounds = array<i64: 1, 320>}]} {
    %c0 = arith.constant 0 : index
    %c0_0 = arith.constant 0 : index
    %0 = vector.load %arg1[%c0, %c0_0] : memref<1x640xf32, #tpu.memory_space<vmem>>, vector<1x640xf32>
    %c0_1 = arith.constant 0 : index
    %c0_2 = arith.constant 0 : index
    %1 = vector.load %arg2[%c0_1, %c0_2] : memref<640x320xf32, #tpu.memory_space<vmem>>, vector<640x320xf32>
    %cst = arith.constant dense<0.000000e+00> : vector<1x320xf32>
    %2 = tpu.matmul %0, %1, %cst {dimension_numbers = #tpu.dot_dimension_numbers<[1], [0], [0], [1], [0, 0, 1, 1], [], []>} : vector<1x640xf32>, vector<640x320xf32>, vector<1x320xf32> -> vector<1x320xf32>
    %c0_3 = arith.constant 0 : index
    %c0_4 = arith.constant 0 : index
    %3 = vector.load %arg3[%c0_3, %c0_4] : memref<1x320xf32, #tpu.memory_space<vmem>>, vector<1x320xf32>
    %4 = arith.addf %2, %3 : vector<1x320xf32>
    %c0_5 = arith.constant 0 : index
    %c0_6 = arith.constant 0 : index
    %5 = vector.load %arg4[%c0_5, %c0_6] : memref<1x320xf32, #tpu.memory_space<vmem>>, vector<1x320xf32>
    tpu.vector_store %arg4[%c0_5, %c0_6], %4 {strides = array<i32>} : memref<1x320xf32, #tpu.memory_space<vmem>>, vector<1x320xf32>,
    return
  }
  func.func @transform_0(%arg0: i32) -> (i32, i32) {
    %c0_i32 = arith.constant 0 : i32
    %c0_i32_0 = arith.constant 0 : i32
    return %arg0, %c0_i32 : i32, i32
  }
  func.func @transform_1(%arg0: i32) -> (i32, i32) {
    %c0_i32 = arith.constant 0 : i32
    %c0_i32_0 = arith.constant 0 : i32
    %c0_i32_1 = arith.constant 0 : i32
    return %c0_i32, %c0_i32_0 : i32, i32
  }
  func.func @transform_2(%arg0: i32) -> (i32, i32) {
    %c0_i32 = arith.constant 0 : i32
    %c0_i32_0 = arith.constant 0 : i32
    %c0_i32_1 = arith.constant 0 : i32
    return %c0_i32, %c0_i32_0 : i32, i32
  }
  func.func @transform_3(%arg0: i32) -> (i32, i32) {
    %c0_i32 = arith.constant 0 : i32
    %c0_i32_0 = arith.constant 0 : i32
    return %arg0, %c0_i32 : i32, i32
  }
}

</mosaic_0001>

<llo_original>
// kernel: linear_forward.1
$region0: #{linear_forward.1}
  #allocation0 [shape = 'u32[]', space=smem, size = 0x4, offset = 0x4, fixed_abs, tag = 'smem constant byte address 0x4 - core index']
  #allocation1 [shape = 'u32[144,128]{1,0:T(1,128)}', space=vmem, size = 0x12000, scoped, tag = 'internal scratch']
  %s0 = inlined_call_operand.vmem [shape: f32[1,640], index: 0, kind: input, shape index: {}]
  %s1 = inlined_call_operand.vmem [shape: f32[640,320], index: 1, kind: input, shape index: {}]
  %s2 = inlined_call_operand.vmem [shape: f32[1,320], index: 2, kind: input, shape index: {}]
  %s3 = inlined_call_operand.vmem [shape: f32[1,320], index: 3, kind: output, shape index: {}]
  %s4 = sld [smem:[#allocation0]]
  $region22: #{linear_forward.1} parent=0
    _
  %s6 = ssub.s32 1, %s4
  %s7 = scalar_select 0, %s6, %s4
  // Predicated region
  $region2: #{linear_forward.1} parent=0 // pred_check
    _
  $region3: #{linear_forward.1} parent=0 // pred_check_branch
    %9 = sbr.rel (0) target = $region5
  $region4: #{linear_forward.1} parent=0 // pred_region
    _
  $region5: #{linear_forward.1} parent=0 // pred_fallthru
    _
  // Predicated region
  $region6: #{linear_forward.1} parent=0 // pred_check
    _
  $region7: #{linear_forward.1} parent=0 // pred_check_branch
    %11 = sbr.rel (0) target = $region9
  $region8: #{linear_forward.1} parent=0 // pred_region
    _
  $region9: #{linear_forward.1} parent=0 // pred_fallthru
    _
  // Predicated region
  $region10: #{linear_forward.1} parent=0 // pred_check
    _
  $region11: #{linear_forward.1} parent=0 // pred_check_branch
    %13 = sbr.rel (0) target = $region13
  $region12: #{linear_forward.1} parent=0 // pred_region
    _
  $region13: #{linear_forward.1} parent=0 // pred_fallthru
    _
  %v14 = vld [vmem:[%s0] sm:$0x1f]
  %v15 = vld [vmem:[%s1] sm:$0xff]
  %v16 = vld [vmem:[%s1 + $0x8] sm:$0xff]
  %v17 = vld [vmem:[%s1 + $0x10] sm:$0xff]
  %v18 = vld [vmem:[%s1 + $0x18] sm:$0xff]
  %v19 = vld [vmem:[%s1 + $0x20] sm:$0xff]
  %v20 = vld [vmem:[%s1 + $0x28] sm:$0xff]
  %v21 = vld [vmem:[%s1 + $0x30] sm:$0xff]
  %v22 = vld [vmem:[%s1 + $0x38] sm:$0xff]
  %v23 = vld [vmem:[%s1 + $0x40] sm:$0xff]
  %v24 = vld [vmem:[%s1 + $0x48] sm:$0xff]
  %v25 = vld [vmem:[%s1 + $0x50] sm:$0xff]
  %v26 = vld [vmem:[%s1 + $0x58] sm:$0xff]
  %v27 = vld [vmem:[%s1 + $0x60] sm:$0xff]
  %v28 = vld [vmem:[%s1 + $0x68] sm:$0xff]
  %v29 = vld [vmem:[%s1 + $0x70] sm:$0xff]
  %v30 = vld [vmem:[%s1 + $0x78] sm:$0xff]
  %v31 = vld [vmem:[%s1 + $0x80] sm:$0xff]
  %v32 = vld [vmem:[%s1 + $0x88] sm:$0xff]
  %v33 = vld [vmem:[%s1 + $0x90] sm:$0xff]
  %v34 = vld [vmem:[%s1 + $0x98] sm:$0xff]
  %v35 = vld [vmem:[%s1 + $0xa0] sm:$0xff]
  %v36 = vld [vmem:[%s1 + $0xa8] sm:$0xff]
  %v37 = vld [vmem:[%s1 + $0xb0] sm:$0xff]
  %v38 = vld [vmem:[%s1 + $0xb8] sm:$0xff]
  %v39 = vld [vmem:[%s1 + $0xc0] sm:$0xff]
  %v40 = vld [vmem:[%s1 + $0xc8] sm:$0xff]
  %v41 = vld [vmem:[%s1 + $0xd0] sm:$0xff]
  %v42 = vld [vmem:[%s1 + $0xd8] sm:$0xff]
  %v43 = vld [vmem:[%s1 + $0xe0] sm:$0xff]
  %v44 = vld [vmem:[%s1 + $0xe8] sm:$0xff]
  %v45 = vld [vmem:[%s1 + $0xf0] sm:$0xff]
  %v46 = vld [vmem:[%s1 + $0xf8] sm:$0xff]
  %v47 = vld [vmem:[%s1 + $0x100] sm:$0xff]
  %v48 = vld [vmem:[%s1 + $0x108] sm:$0xff]
  %v49 = vld [vmem:[%s1 + $0x110] sm:$0xff]
  %v50 = vld [vmem:[%s1 + $0x118] sm:$0xff]
  %v51 = vld [vmem:[%s1 + $0x120] sm:$0xff]
  %v52 = vld [vmem:[%s1 + $0x128] sm:$0xff]
  %v53 = vld [vmem:[%s1 + $0x130] sm:$0xff]
  %v54 = vld [vmem:[%s1 + $0x138] sm:$0xff]
  %v55 = vld [vmem:[%s1 + $0x140] sm:$0xff]
  %v56 = vld [vmem:[%s1 + $0x148] sm:$0xff]
  %v57 = vld [vmem:[%s1 + $0x150] sm:$0xff]
  %v58 = vld [vmem:[%s1 + $0x158] sm:$0xff]
  %v59 = vld [vmem:[%s1 + $0x160] sm:$0xff]
  %v60 = vld [vmem:[%s1 + $0x168] sm:$0xff]
  %v61 = vld [vmem:[%s1 + $0x170] sm:$0xff]
  %v62 = vld [vmem:[%s1 + $0x178] sm:$0xff]
  %v63 = vld [vmem:[%s1 + $0x180] sm:$0xff]
  %v64 = vld [vmem:[%s1 + $0x188] sm:$0xff]
  %v65 = vld [vmem:[%s1 + $0x190] sm:$0xff]
  %v66 = vld [vmem:[%s1 + $0x198] sm:$0xff]
  %v67 = vld [vmem:[%s1 + $0x1a0] sm:$0xff]
  %v68 = vld [vmem:[%s1 + $0x1a8] sm:$0xff]
  %v69 = vld [vmem:[%s1 + $0x1b0] sm:$0xff]
  %v70 = vld [vmem:[%s1 + $0x1b8] sm:$0xff]
  %v71 = vld [vmem:[%s1 + $0x1c0] sm:$0xff]
  %v72 = vld [vmem:[%s1 + $0x1c8] sm:$0xff]
  %v73 = vld [vmem:[%s1 + $0x1d0] sm:$0xff]
  %v74 = vld [vmem:[%s1 + $0x1d8] sm:$0xff]
  %v75 = vld [vmem:[%s1 + $0x1e0] sm:$0xff]
  %v76 = vld [vmem:[%s1 + $0x1e8] sm:$0xff]
  %v77 = vld [vmem:[%s1 + $0x1f0] sm:$0xff]
  %v78 = vld [vmem:[%s1 + $0x1f8] sm:$0xff]
  %v79 = vld [vmem:[%s1 + $0x200] sm:$0xff]
  %v80 = vld [vmem:[%s1 + $0x208] sm:$0xff]
  %v81 = vld [vmem:[%s1 + $0x210] sm:$0xff]
  %v82 = vld [vmem:[%s1 + $0x218] sm:$0xff]
  %v83 = vld [vmem:[%s1 + $0x220] sm:$0xff]
  %v84 = vld [vmem:[%s1 + $0x228] sm:$0xff]
  %v85 = vld [vmem:[%s1 + $0x230] sm:$0xff]
  %v86 = vld [vmem:[%s1 + $0x238] sm:$0xff]
  %v87 = vld [vmem:[%s1 + $0x240] sm:$0xff]
  %v88 = vld [vmem:[%s1 + $0x248] sm:$0xff]
  %v89 = vld [vmem:[%s1 + $0x250] sm:$0xff]
  %v90 = vld [vmem:[%s1 + $0x258] sm:$0xff]
  %v91 = vld [vmem:[%s1 + $0x260] sm:$0xff]
  %v92 = vld [vmem:[%s1 + $0x268] sm:$0xff]
  %v93 = vld [vmem:[%s1 + $0x270] sm:$0xff]
  %v94 = vld [vmem:[%s1 + $0x278] sm:$0xff]
  %v95 = vld [vmem:[%s1 + $0x280] sm:$0xff]
  %v96 = vld [vmem:[%s1 + $0x288] sm:$0xff]
  %v97 = vld [vmem:[%s1 + $0x290] sm:$0xff]
  %v98 = vld [vmem:[%s1 + $0x298] sm:$0xff]
  %v99 = vld [vmem:[%s1 + $0x2a0] sm:$0xff]
  %v100 = vld [vmem:[%s1 + $0x2a8] sm:$0xff]
  %v101 = vld [vmem:[%s1 + $0x2b0] sm:$0xff]
  %v102 = vld [vmem:[%s1 + $0x2b8] sm:$0xff]
  %v103 = vld [vmem:[%s1 + $0x2c0] sm:$0xff]
  %v104 = vld [vmem:[%s1 + $0x2c8] sm:$0xff]
  %v105 = vld [vmem:[%s1 + $0x2d0] sm:$0xff]
  %v106 = vld [vmem:[%s1 + $0x2d8] sm:$0xff]
  %v107 = vld [vmem:[%s1 + $0x2e0] sm:$0xff]
  %v108 = vld [vmem:[%s1 + $0x2e8] sm:$0xff]
  %v109 = vld [vmem:[%s1 + $0x2f0] sm:$0xff]
  %v110 = vld [vmem:[%s1 + $0x2f8] sm:$0xff]
  %v111 = vld [vmem:[%s1 + $0x300] sm:$0xff]
  %v112 = vld [vmem:[%s1 + $0x308] sm:$0xff]
  %v113 = vld [vmem:[%s1 + $0x310] sm:$0xff]
  %v114 = vld [vmem:[%s1 + $0x318] sm:$0xff]
  %v115 = vld [vmem:[%s1 + $0x320] sm:$0xff]
  %v116 = vld [vmem:[%s1 + $0x328] sm:$0xff]
  %v117 = vld [vmem:[%s1 + $0x330] sm:$0xff]
  %v118 = vld [vmem:[%s1 + $0x338] sm:$0xff]
  %v119 = vld [vmem:[%s1 + $0x340] sm:$0xff]
  %v120 = vld [vmem:[%s1 + $0x348] sm:$0xff]
  %v121 = vld [vmem:[%s1 + $0x350] sm:$0xff]
  %v122 = vld [vmem:[%s1 + $0x358] sm:$0xff]
  %v123 = vld [vmem:[%s1 + $0x360] sm:$0xff]
  %v124 = vld [vmem:[%s1 + $0x368] sm:$0xff]
  %v125 = vld [vmem:[%s1 + $0x370] sm:$0xff]
  %v126 = vld [vmem:[%s1 + $0x378] sm:$0xff]
  %v127 = vld [vmem:[%s1 + $0x380] sm:$0xff]
  %v128 = vld [vmem:[%s1 + $0x388] sm:$0xff]
  %v129 = vld [vmem:[%s1 + $0x390] sm:$0xff]
  %v130 = vld [vmem:[%s1 + $0x398] sm:$0xff]
  %v131 = vld [vmem:[%s1 + $0x3a0] sm:$0xff]
  %v132 = vld [vmem:[%s1 + $0x3a8] sm:$0xff]
  %v133 = vld [vmem:[%s1 + $0x3b0] sm:$0xff]
  %v134 = vld [vmem:[%s1 + $0x3b8] sm:$0xff]
  %v135 = vld [vmem:[%s1 + $0x3c0] sm:$0xff]
  %v136 = vld [vmem:[%s1 + $0x3c8] sm:$0xff]
  %v137 = vld [vmem:[%s1 + $0x3d0] sm:$0xff]
  %v138 = vld [vmem:[%s1 + $0x3d8] sm:$0xff]
  %v139 = vld [vmem:[%s1 + $0x3e0] sm:$0xff]
  %v140 = vld [vmem:[%s1 + $0x3e8] sm:$0xff]
  %v141 = vld [vmem:[%s1 + $0x3f0] sm:$0xff]
  %v142 = vld [vmem:[%s1 + $0x3f8] sm:$0xff]
  %v143 = vld [vmem:[%s1 + $0x400] sm:$0xff]
  %v144 = vld [vmem:[%s1 + $0x408] sm:$0xff]
  %v145 = vld [vmem:[%s1 + $0x410] sm:$0xff]
  %v146 = vld [vmem:[%s1 + $0x418] sm:$0xff]
  %v147 = vld [vmem:[%s1 + $0x420] sm:$0xff]
  %v148 = vld [vmem:[%s1 + $0x428] sm:$0xff]
  %v149 = vld [vmem:[%s1 + $0x430] sm:$0xff]
  %v150 = vld [vmem:[%s1 + $0x438] sm:$0xff]
  %v151 = vld [vmem:[%s1 + $0x440] sm:$0xff]
  %v152 = vld [vmem:[%s1 + $0x448] sm:$0xff]
  %v153 = vld [vmem:[%s1 + $0x450] sm:$0xff]
  %v154 = vld [vmem:[%s1 + $0x458] sm:$0xff]
  %v155 = vld [vmem:[%s1 + $0x460] sm:$0xff]
  %v156 = vld [vmem:[%s1 + $0x468] sm:$0xff]
  %v157 = vld [vmem:[%s1 + $0x470] sm:$0xff]
  %v158 = vld [vmem:[%s1 + $0x478] sm:$0xff]
  %v159 = vld [vmem:[%s1 + $0x480] sm:$0xff]
  %v160 = vld [vmem:[%s1 + $0x488] sm:$0xff]
  %v161 = vld [vmem:[%s1 + $0x490] sm:$0xff]
  %v162 = vld [vmem:[%s1 + $0x498] sm:$0xff]
  %v163 = vld [vmem:[%s1 + $0x4a0] sm:$0xff]
  %v164 = vld [vmem:[%s1 + $0x4a8] sm:$0xff]
  %v165 = vld [vmem:[%s1 + $0x4b0] sm:$0xff]
  %v166 = vld [vmem:[%s1 + $0x4b8] sm:$0xff]
  %v167 = vld [vmem:[%s1 + $0x4c0] sm:$0xff]
  %v168 = vld [vmem:[%s1 + $0x4c8] sm:$0xff]
  %v169 = vld [vmem:[%s1 + $0x4d0] sm:$0xff]
  %v170 = vld [vmem:[%s1 + $0x4d8] sm:$0xff]
  %v171 = vld [vmem:[%s1 + $0x4e0] sm:$0xff]
  %v172 = vld [vmem:[%s1 + $0x4e8] sm:$0xff]
  %v173 = vld [vmem:[%s1 + $0x4f0] sm:$0xff]
  %v174 = vld [vmem:[%s1 + $0x4f8] sm:$0xff]
  %v175 = vld [vmem:[%s1 + $0x500] sm:$0xff]
  %v176 = vld [vmem:[%s1 + $0x508] sm:$0xff]
  %v177 = vld [vmem:[%s1 + $0x510] sm:$0xff]
  %v178 = vld [vmem:[%s1 + $0x518] sm:$0xff]
  %v179 = vld [vmem:[%s1 + $0x520] sm:$0xff]
  %v180 = vld [vmem:[%s1 + $0x528] sm:$0xff]
  %v181 = vld [vmem:[%s1 + $0x530] sm:$0xff]
  %v182 = vld [vmem:[%s1 + $0x538] sm:$0xff]
  %v183 = vld [vmem:[%s1 + $0x540] sm:$0xff]
  %v184 = vld [vmem:[%s1 + $0x548] sm:$0xff]
  %v185 = vld [vmem:[%s1 + $0x550] sm:$0xff]
  %v186 = vld [vmem:[%s1 + $0x558] sm:$0xff]
  %v187 = vld [vmem:[%s1 + $0x560] sm:$0xff]
  %v188 = vld [vmem:[%s1 + $0x568] sm:$0xff]
  %v189 = vld [vmem:[%s1 + $0x570] sm:$0xff]
  %v190 = vld [vmem:[%s1 + $0x578] sm:$0xff]
  %v191 = vld [vmem:[%s1 + $0x580] sm:$0xff]
  %v192 = vld [vmem:[%s1 + $0x588] sm:$0xff]
  %v193 = vld [vmem:[%s1 + $0x590] sm:$0xff]
  %v194 = vld [vmem:[%s1 + $0x598] sm:$0xff]
  %v195 = vld [vmem:[%s1 + $0x5a0] sm:$0xff]
  %v196 = vld [vmem:[%s1 + $0x5a8] sm:$0xff]
  %v197 = vld [vmem:[%s1 + $0x5b0] sm:$0xff]
  %v198 = vld [vmem:[%s1 + $0x5b8] sm:$0xff]
  %v199 = vld [vmem:[%s1 + $0x5c0] sm:$0xff]
  %v200 = vld [vmem:[%s1 + $0x5c8] sm:$0xff]
  %v201 = vld [vmem:[%s1 + $0x5d0] sm:$0xff]
  %v202 = vld [vmem:[%s1 + $0x5d8] sm:$0xff]
  %v203 = vld [vmem:[%s1 + $0x5e0] sm:$0xff]
  %v204 = vld [vmem:[%s1 + $0x5e8] sm:$0xff]
  %v205 = vld [vmem:[%s1 + $0x5f0] sm:$0xff]
  %v206 = vld [vmem:[%s1 + $0x5f8] sm:$0xff]
  %v207 = vld [vmem:[%s1 + $0x600] sm:$0xff]
  %v208 = vld [vmem:[%s1 + $0x608] sm:$0xff]
  %v209 = vld [vmem:[%s1 + $0x610] sm:$0xff]
  %v210 = vld [vmem:[%s1 + $0x618] sm:$0xff]
  %v211 = vld [vmem:[%s1 + $0x620] sm:$0xff]
  %v212 = vld [vmem:[%s1 + $0x628] sm:$0xff]
  %v213 = vld [vmem:[%s1 + $0x630] sm:$0xff]
  %v214 = vld [vmem:[%s1 + $0x638] sm:$0xff]
  %v215 = vld [vmem:[%s1 + $0x640] sm:$0xff]
  %v216 = vld [vmem:[%s1 + $0x648] sm:$0xff]
  %v217 = vld [vmem:[%s1 + $0x650] sm:$0xff]
  %v218 = vld [vmem:[%s1 + $0x658] sm:$0xff]
  %v219 = vld [vmem:[%s1 + $0x660] sm:$0xff]
  %v220 = vld [vmem:[%s1 + $0x668] sm:$0xff]
  %v221 = vld [vmem:[%s1 + $0x670] sm:$0xff]
  %v222 = vld [vmem:[%s1 + $0x678] sm:$0xff]
  %v223 = vld [vmem:[%s1 + $0x680] sm:$0xff]
  %v224 = vld [vmem:[%s1 + $0x688] sm:$0xff]
  %v225 = vld [vmem:[%s1 + $0x690] sm:$0xff]
  %v226 = vld [vmem:[%s1 + $0x698] sm:$0xff]
  %v227 = vld [vmem:[%s1 + $0x6a0] sm:$0xff]
  %v228 = vld [vmem:[%s1 + $0x6a8] sm:$0xff]
  %v229 = vld [vmem:[%s1 + $0x6b0] sm:$0xff]
  %v230 = vld [vmem:[%s1 + $0x6b8] sm:$0xff]
  %v231 = vld [vmem:[%s1 + $0x6c0] sm:$0xff]
  %v232 = vld [vmem:[%s1 + $0x6c8] sm:$0xff]
  %v233 = vld [vmem:[%s1 + $0x6d0] sm:$0xff]
  %v234 = vld [vmem:[%s1 + $0x6d8] sm:$0xff]
  %v235 = vld [vmem:[%s1 + $0x6e0] sm:$0xff]
  %v236 = vld [vmem:[%s1 + $0x6e8] sm:$0xff]
  %v237 = vld [vmem:[%s1 + $0x6f0] sm:$0xff]
  %v238 = vld [vmem:[%s1 + $0x6f8] sm:$0xff]
  %v239 = vld [vmem:[%s1 + $0x700] sm:$0xff]
  %v240 = vld [vmem:[%s1 + $0x708] sm:$0xff]
  %v241 = vld [vmem:[%s1 + $0x710] sm:$0xff]
  %v242 = vld [vmem:[%s1 + $0x718] sm:$0xff]
  %v243 = vld [vmem:[%s1 + $0x720] sm:$0xff]
  %v244 = vld [vmem:[%s1 + $0x728] sm:$0xff]
  %v245 = vld [vmem:[%s1 + $0x730] sm:$0xff]
  %v246 = vld [vmem:[%s1 + $0x738] sm:$0xff]
  %v247 = vld [vmem:[%s1 + $0x740] sm:$0xff]
  %v248 = vld [vmem:[%s1 + $0x748] sm:$0xff]
  %v249 = vld [vmem:[%s1 + $0x750] sm:$0xff]
  %v250 = vld [vmem:[%s1 + $0x758] sm:$0xff]
  %v251 = vld [vmem:[%s1 + $0x760] sm:$0xff]
  %v252 = vld [vmem:[%s1 + $0x768] sm:$0xff]
  %v253 = vld [vmem:[%s1 + $0x770] sm:$0xff]
  %v254 = vld [vmem:[%s1 + $0x778] sm:$0xff]
  %v255 = vld [vmem:[%s2] sm:$0x7]
  %v257 = vlaneseq
  %v258 = vshrl.u32 %v257, 7
  %v259 = vsub.s32 0, %v258
  %v260 = vrot.slane %v14, %v259
  %v261 = vlaneseq
  %v262 = vshrl.u32 %v261, 7
  %v263 = vsub.s32 1, %v262
  %v264 = vrot.slane %v14, %v263
  %v265 = vlaneseq
  %v266 = vshrl.u32 %v265, 7
  %v267 = vsub.s32 2, %v266
  %v268 = vrot.slane %v14, %v267
  %v269 = vlaneseq
  %v270 = vshrl.u32 %v269, 7
  %v271 = vsub.s32 3, %v270
  %v272 = vrot.slane %v14, %v271
  %v273 = vlaneseq
  %v274 = vshrl.u32 %v273, 7
  %v275 = vsub.s32 4, %v274
  %v276 = vrot.slane %v14, %v275
  %v283 = vlaneseq
  %v284 = vshrl.u32 %v283, 7
  %v285 = vsub.s32 0, %v284
  %v286 = vrot.slane %v255, %v285
  %v287 = vlaneseq
  %v288 = vshrl.u32 %v287, 7
  %v289 = vsub.s32 1, %v288
  %v290 = vrot.slane %v255, %v289
  %v291 = vlaneseq
  %v292 = vshrl.u32 %v291, 7
  %v293 = vsub.s32 2, %v292
  %v294 = vrot.slane %v255, %v293
  %298 = vmatprep.subr.mxu0 %v61
  %299 = vmatpush1.msra.mxu0 %v60
  %300 = vmatprep.subr.mxu0 %v58
  %301 = vmatpush1.msra.mxu0 %v57
  %302 = vmatprep.subr.mxu0 %v55
  %303 = vmatpush1.msra.mxu0 %v54
  %304 = vmatprep.subr.mxu0 %v52
  %305 = vmatpush1.msra.mxu0 %v51
  %306 = vmatprep.subr.mxu0 %v49
  %307 = vmatpush1.msra.mxu0 %v48
  %308 = vmatprep.subr.mxu0 %v46
  %309 = vmatpush1.msra.mxu0 %v45
  %310 = vmatprep.subr.mxu0 %v43
  %311 = vmatpush1.msra.mxu0 %v42
  %312 = vmatprep.subr.mxu0 %v40
  %313 = vmatpush1.msra.mxu0 %v39
  %314 = vmatprep.subr.mxu0 %v37
  %315 = vmatpush1.msra.mxu0 %v36
  %316 = vmatprep.subr.mxu0 %v34
  %317 = vmatpush1.msra.mxu0 %v33
  %318 = vmatprep.subr.mxu0 %v31
  %319 = vmatpush1.msra.mxu0 %v30
  %320 = vmatprep.subr.mxu0 %v28
  %321 = vmatpush1.msra.mxu0 %v27
  %322 = vmatprep.subr.mxu0 %v25
  %323 = vmatpush1.msra.mxu0 %v24
  %324 = vmatprep.subr.mxu0 %v22
  %325 = vmatpush1.msra.mxu0 %v21
  %326 = vmatprep.subr.mxu0 %v19
  %327 = vmatpush1.msra.mxu0 %v18
  %328 = vmatprep.subr.mxu0 %v16
  %329 = vmatpush1.msra.mxu0 %v15
  %330 = vmatprep.subr.mxu0 %v109
  %331 = vmatpush2.msra.mxu0 %v108
  %332 = vmatprep.subr.mxu0 %v106
  %333 = vmatpush2.msra.mxu0 %v105
  %334 = vmatprep.subr.mxu0 %v103
  %335 = vmatpush2.msra.mxu0 %v102
  %336 = vmatprep.subr.mxu0 %v100
  %337 = vmatpush2.msra.mxu0 %v99
  %338 = vmatprep.subr.mxu0 %v97
  %339 = vmatpush2.msra.mxu0 %v96
  %340 = vmatprep.subr.mxu0 %v94
  %341 = vmatpush2.msra.mxu0 %v93
  %342 = vmatprep.subr.mxu0 %v91
  %343 = vmatpush2.msra.mxu0 %v90
  %344 = vmatprep.subr.mxu0 %v88
  %345 = vmatpush2.msra.mxu0 %v87
  %346 = vmatprep.subr.mxu0 %v85
  %347 = vmatpush2.msra.mxu0 %v84
  %348 = vmatprep.subr.mxu0 %v82
  %349 = vmatpush2.msra.mxu0 %v81
  %350 = vmatprep.subr.mxu0 %v79
  %351 = vmatpush2.msra.mxu0 %v78
  %352 = vmatprep.subr.mxu0 %v76
  %353 = vmatpush2.msra.mxu0 %v75
  %354 = vmatprep.subr.mxu0 %v73
  %355 = vmatpush2.msra.mxu0 %v72
  %356 = vmatprep.subr.mxu0 %v70
  %357 = vmatpush2.msra.mxu0 %v69
  %358 = vmatprep.subr.mxu0 %v67
  %359 = vmatpush2.msra.mxu0 %v66
  %360 = vmatprep.subr.mxu0 %v64
  %361 = vmatpush2.msra.mxu0 %v63
  %362 = vmatprep.mubr.f32.mxu0 %v264
  %363 = vmatmul.mubr.f32.gmra.mxu0 %v260
  %v364 = vpop.f32.mrf.mxu0
  %v365 = vadd.f32 %v286, %v364
  %v366 = vpop.f32.mrf.mxu0
  %v367 = vadd.f32 %v290, %v366
  %368 = vdwg.mxu0
  %369 = vmatprep.subr.mxu0 %v157
  %370 = vmatpush1.msra.mxu0 %v156
  %371 = vmatprep.subr.mxu0 %v154
  %372 = vmatpush1.msra.mxu0 %v153
  %373 = vmatprep.subr.mxu0 %v151
  %374 = vmatpush1.msra.mxu0 %v150
  %375 = vmatprep.subr.mxu0 %v148
  %376 = vmatpush1.msra.mxu0 %v147
  %377 = vmatprep.subr.mxu0 %v145
  %378 = vmatpush1.msra.mxu0 %v144
  %379 = vmatprep.subr.mxu0 %v142
  %380 = vmatpush1.msra.mxu0 %v141
  %381 = vmatprep.subr.mxu0 %v139
  %382 = vmatpush1.msra.mxu0 %v138
  %383 = vmatprep.subr.mxu0 %v136
  %384 = vmatpush1.msra.mxu0 %v135
  %385 = vmatprep.subr.mxu0 %v133
  %386 = vmatpush1.msra.mxu0 %v132
  %387 = vmatprep.subr.mxu0 %v130
  %388 = vmatpush1.msra.mxu0 %v129
  %389 = vmatprep.subr.mxu0 %v127
  %390 = vmatpush1.msra.mxu0 %v126
  %391 = vmatprep.subr.mxu0 %v124
  %392 = vmatpush1.msra.mxu0 %v123
  %393 = vmatprep.subr.mxu0 %v121
  %394 = vmatpush1.msra.mxu0 %v120
  %395 = vmatprep.subr.mxu0 %v118
  %396 = vmatpush1.msra.mxu0 %v117
  %397 = vmatprep.subr.mxu0 %v115
  %398 = vmatpush1.msra.mxu0 %v114
  %399 = vmatprep.subr.mxu0 %v112
  %400 = vmatpush1.msra.mxu0 %v111
  %401 = vmatprep.subr.mxu0 %v205
  %402 = vmatpush2.msra.mxu0 %v204
  %403 = vmatprep.subr.mxu0 %v202
  %404 = vmatpush2.msra.mxu0 %v201
  %405 = vmatprep.subr.mxu0 %v199
  %406 = vmatpush2.msra.mxu0 %v198
  %407 = vmatprep.subr.mxu0 %v196
  %408 = vmatpush2.msra.mxu0 %v195
  %409 = vmatprep.subr.mxu0 %v193
  %410 = vmatpush2.msra.mxu0 %v192
  %411 = vmatprep.subr.mxu0 %v190
  %412 = vmatpush2.msra.mxu0 %v189
  %413 = vmatprep.subr.mxu0 %v187
  %414 = vmatpush2.msra.mxu0 %v186
  %415 = vmatprep.subr.mxu0 %v184
  %416 = vmatpush2.msra.mxu0 %v183
  %417 = vmatprep.subr.mxu0 %v181
  %418 = vmatpush2.msra.mxu0 %v180
  %419 = vmatprep.subr.mxu0 %v178
  %420 = vmatpush2.msra.mxu0 %v177
  %421 = vmatprep.subr.mxu0 %v175
  %422 = vmatpush2.msra.mxu0 %v174
  %423 = vmatprep.subr.mxu0 %v172
  %424 = vmatpush2.msra.mxu0 %v171
  %425 = vmatprep.subr.mxu0 %v169
  %426 = vmatpush2.msra.mxu0 %v168
  %427 = vmatprep.subr.mxu0 %v166
  %428 = vmatpush2.msra.mxu0 %v165
  %429 = vmatprep.subr.mxu0 %v163
  %430 = vmatpush2.msra.mxu0 %v162
  %431 = vmatprep.subr.mxu0 %v160
  %432 = vmatpush2.msra.mxu0 %v159
  %433 = vmatprep.mubr.f32.mxu0 %v272
  %434 = vmatmul.mubr.f32.gmra.mxu0 %v268
  %v435 = vpop.f32.mrf.mxu0
  %v436 = vadd.f32 %v365, %v435
  %v437 = vpop.f32.mrf.mxu0
  %v438 = vadd.f32 %v367, %v437
  %439 = vdwg.mxu0
  %440 = vmatprep.subr.mxu0 %v253
  %441 = vmatpush1.msra.mxu0 %v252
  %442 = vmatprep.subr.mxu0 %v250
  %443 = vmatpush1.msra.mxu0 %v249
  %444 = vmatprep.subr.mxu0 %v247
  %445 = vmatpush1.msra.mxu0 %v246
  %446 = vmatprep.subr.mxu0 %v244
  %447 = vmatpush1.msra.mxu0 %v243
  %448 = vmatprep.subr.mxu0 %v241
  %449 = vmatpush1.msra.mxu0 %v240
  %450 = vmatprep.subr.mxu0 %v238
  %451 = vmatpush1.msra.mxu0 %v237
  %452 = vmatprep.subr.mxu0 %v235
  %453 = vmatpush1.msra.mxu0 %v234
  %454 = vmatprep.subr.mxu0 %v232
  %455 = vmatpush1.msra.mxu0 %v231
  %456 = vmatprep.subr.mxu0 %v229
  %457 = vmatpush1.msra.mxu0 %v228
  %458 = vmatprep.subr.mxu0 %v226
  %459 = vmatpush1.msra.mxu0 %v225
  %460 = vmatprep.subr.mxu0 %v223
  %461 = vmatpush1.msra.mxu0 %v222
  %462 = vmatprep.subr.mxu0 %v220
  %463 = vmatpush1.msra.mxu0 %v219
  %464 = vmatprep.subr.mxu0 %v217
  %465 = vmatpush1.msra.mxu0 %v216
  %466 = vmatprep.subr.mxu0 %v214
  %467 = vmatpush1.msra.mxu0 %v213
  %468 = vmatprep.subr.mxu0 %v211
  %469 = vmatpush1.msra.mxu0 %v210
  %470 = vmatprep.subr.mxu0 %v208
  %471 = vmatpush1.msra.mxu0 %v207
  %472 = vmatprep.subr.mxu0 0.0
  %473 = vmatpush2.msra.mxu0 0.0
  %474 = vmatprep.subr.mxu0 0.0
  %475 = vmatpush2.msra.mxu0 0.0
  %476 = vmatprep.subr.mxu0 0.0
  %477 = vmatpush2.msra.mxu0 0.0
  %478 = vmatprep.subr.mxu0 0.0
  %479 = vmatpush2.msra.mxu0 0.0
  %480 = vmatprep.subr.mxu0 0.0
  %481 = vmatpush2.msra.mxu0 0.0
  %482 = vmatprep.subr.mxu0 0.0
  %483 = vmatpush2.msra.mxu0 0.0
  %484 = vmatprep.subr.mxu0 0.0
  %485 = vmatpush2.msra.mxu0 0.0
  %486 = vmatprep.subr.mxu0 0.0
  %487 = vmatpush2.msra.mxu0 0.0
  %488 = vmatprep.subr.mxu0 0.0
  %489 = vmatpush2.msra.mxu0 0.0
  %490 = vmatprep.subr.mxu0 0.0
  %491 = vmatpush2.msra.mxu0 0.0
  %492 = vmatprep.subr.mxu0 0.0
  %493 = vmatpush2.msra.mxu0 0.0
  %494 = vmatprep.subr.mxu0 0.0
  %495 = vmatpush2.msra.mxu0 0.0
  %496 = vmatprep.subr.mxu0 0.0
  %497 = vmatpush2.msra.mxu0 0.0
  %498 = vmatprep.subr.mxu0 0.0
  %499 = vmatpush2.msra.mxu0 0.0
  %500 = vmatprep.subr.mxu0 0.0
  %501 = vmatpush2.msra.mxu0 0.0
  %502 = vmatprep.subr.mxu0 0.0
  %503 = vmatpush2.msra.mxu0 0.0
  %504 = vmatprep.mubr.f32.mxu0 0.0
  %505 = vmatmul.mubr.f32.gmra.mxu0 %v276
  %v506 = vpop.f32.mrf.mxu0
  %v507 = vadd.f32 %v436, %v506
  %v508 = vpop.f32.mrf.mxu0
  %v509 = vadd.f32 %v438, %v508
  %510 = vdwg.mxu0
  %511 = vmatprep.subr.mxu0 0.0
  %512 = vmatpush1.msra.mxu0 %v62
  %513 = vmatprep.subr.mxu0 0.0
  %514 = vmatpush1.msra.mxu0 %v59
  %515 = vmatprep.subr.mxu0 0.0
  %516 = vmatpush1.msra.mxu0 %v56
  %517 = vmatprep.subr.mxu0 0.0
  %518 = vmatpush1.msra.mxu0 %v53
  %519 = vmatprep.subr.mxu0 0.0
  %520 = vmatpush1.msra.mxu0 %v50
  %521 = vmatprep.subr.mxu0 0.0
  %522 = vmatpush1.msra.mxu0 %v47
  %523 = vmatprep.subr.mxu0 0.0
  %524 = vmatpush1.msra.mxu0 %v44
  %525 = vmatprep.subr.mxu0 0.0
  %526 = vmatpush1.msra.mxu0 %v41
  %527 = vmatprep.subr.mxu0 0.0
  %528 = vmatpush1.msra.mxu0 %v38
  %529 = vmatprep.subr.mxu0 0.0
  %530 = vmatpush1.msra.mxu0 %v35
  %531 = vmatprep.subr.mxu0 0.0
  %532 = vmatpush1.msra.mxu0 %v32
  %533 = vmatprep.subr.mxu0 0.0
  %534 = vmatpush1.msra.mxu0 %v29
  %535 = vmatprep.subr.mxu0 0.0
  %536 = vmatpush1.msra.mxu0 %v26
  %537 = vmatprep.subr.mxu0 0.0
  %538 = vmatpush1.msra.mxu0 %v23
  %539 = vmatprep.subr.mxu0 0.0
  %540 = vmatpush1.msra.mxu0 %v20
  %541 = vmatprep.subr.mxu0 0.0
  %542 = vmatpush1.msra.mxu0 %v17
  %543 = vmatprep.subr.mxu0 0.0
  %544 = vmatpush2.msra.mxu0 %v110
  %545 = vmatprep.subr.mxu0 0.0
  %546 = vmatpush2.msra.mxu0 %v107
  %547 = vmatprep.subr.mxu0 0.0
  %548 = vmatpush2.msra.mxu0 %v104
  %549 = vmatprep.subr.mxu0 0.0
  %550 = vmatpush2.msra.mxu0 %v101
  %551 = vmatprep.subr.mxu0 0.0
  %552 = vmatpush2.msra.mxu0 %v98
  %553 = vmatprep.subr.mxu0 0.0
  %554 = vmatpush2.msra.mxu0 %v95
  %555 = vmatprep.subr.mxu0 0.0
  %556 = vmatpush2.msra.mxu0 %v92
  %557 = vmatprep.subr.mxu0 0.0
  %558 = vmatpush2.msra.mxu0 %v89
  %559 = vmatprep.subr.mxu0 0.0
  %560 = vmatpush2.msra.mxu0 %v86
  %561 = vmatprep.subr.mxu0 0.0
  %562 = vmatpush2.msra.mxu0 %v83
  %563 = vmatprep.subr.mxu0 0.0
  %564 = vmatpush2.msra.mxu0 %v80
  %565 = vmatprep.subr.mxu0 0.0
  %566 = vmatpush2.msra.mxu0 %v77
  %567 = vmatprep.subr.mxu0 0.0
  %568 = vmatpush2.msra.mxu0 %v74
  %569 = vmatprep.subr.mxu0 0.0
  %570 = vmatpush2.msra.mxu0 %v71
  %571 = vmatprep.subr.mxu0 0.0
  %572 = vmatpush2.msra.mxu0 %v68
  %573 = vmatprep.subr.mxu0 0.0
  %574 = vmatpush2.msra.mxu0 %v65
  %575 = vmatprep.mubr.f32.mxu0 %v264
  %576 = vmatmul.mubr.f32.gmra.mxu0 %v260
  %v577 = vpop.f32.mrf.mxu0
  %v578 = vadd.f32 %v294, %v577
  %v579 = vpop.f32.mrf.mxu0
  %580 = vdwg.mxu0
  %581 = vmatprep.subr.mxu0 0.0
  %582 = vmatpush1.msra.mxu0 %v158
  %583 = vmatprep.subr.mxu0 0.0
  %584 = vmatpush1.msra.mxu0 %v155
  %585 = vmatprep.subr.mxu0 0.0
  %586 = vmatpush1.msra.mxu0 %v152
  %587 = vmatprep.subr.mxu0 0.0
  %588 = vmatpush1.msra.mxu0 %v149
  %589 = vmatprep.subr.mxu0 0.0
  %590 = vmatpush1.msra.mxu0 %v146
  %591 = vmatprep.subr.mxu0 0.0
  %592 = vmatpush1.msra.mxu0 %v143
  %593 = vmatprep.subr.mxu0 0.0
  %594 = vmatpush1.msra.mxu0 %v140
  %595 = vmatprep.subr.mxu0 0.0
  %596 = vmatpush1.msra.mxu0 %v137
  %597 = vmatprep.subr.mxu0 0.0
  %598 = vmatpush1.msra.mxu0 %v134
  %599 = vmatprep.subr.mxu0 0.0
  %600 = vmatpush1.msra.mxu0 %v131
  %601 = vmatprep.subr.mxu0 0.0
  %602 = vmatpush1.msra.mxu0 %v128
  %603 = vmatprep.subr.mxu0 0.0
  %604 = vmatpush1.msra.mxu0 %v125
  %605 = vmatprep.subr.mxu0 0.0
  %606 = vmatpush1.msra.mxu0 %v122
  %607 = vmatprep.subr.mxu0 0.0
  %608 = vmatpush1.msra.mxu0 %v119
  %609 = vmatprep.subr.mxu0 0.0
  %610 = vmatpush1.msra.mxu0 %v116
  %611 = vmatprep.subr.mxu0 0.0
  %612 = vmatpush1.msra.mxu0 %v113
  %613 = vmatprep.subr.mxu0 0.0
  %614 = vmatpush2.msra.mxu0 %v206
  %615 = vmatprep.subr.mxu0 0.0
  %616 = vmatpush2.msra.mxu0 %v203
  %617 = vmatprep.subr.mxu0 0.0
  %618 = vmatpush2.msra.mxu0 %v200
  %619 = vmatprep.subr.mxu0 0.0
  %620 = vmatpush2.msra.mxu0 %v197
  %621 = vmatprep.subr.mxu0 0.0
  %622 = vmatpush2.msra.mxu0 %v194
  %623 = vmatprep.subr.mxu0 0.0
  %624 = vmatpush2.msra.mxu0 %v191
  %625 = vmatprep.subr.mxu0 0.0
  %626 = vmatpush2.msra.mxu0 %v188
  %627 = vmatprep.subr.mxu0 0.0
  %628 = vmatpush2.msra.mxu0 %v185
  %629 = vmatprep.subr.mxu0 0.0
  %630 = vmatpush2.msra.mxu0 %v182
  %631 = vmatprep.subr.mxu0 0.0
  %632 = vmatpush2.msra.mxu0 %v179
  %633 = vmatprep.subr.mxu0 0.0
  %634 = vmatpush2.msra.mxu0 %v176
  %635 = vmatprep.subr.mxu0 0.0
  %636 = vmatpush2.msra.mxu0 %v173
  %637 = vmatprep.subr.mxu0 0.0
  %638 = vmatpush2.msra.mxu0 %v170
  %639 = vmatprep.subr.mxu0 0.0
  %640 = vmatpush2.msra.mxu0 %v167
  %641 = vmatprep.subr.mxu0 0.0
  %642 = vmatpush2.msra.mxu0 %v164
  %643 = vmatprep.subr.mxu0 0.0
  %644 = vmatpush2.msra.mxu0 %v161
  %645 = vmatprep.mubr.f32.mxu0 %v272
  %646 = vmatmul.mubr.f32.gmra.mxu0 %v268
  %v647 = vpop.f32.mrf.mxu0
  %v648 = vadd.f32 %v578, %v647
  %v649 = vpop.f32.mrf.mxu0
  %650 = vdwg.mxu0
  %651 = vmatprep.subr.mxu0 0.0
  %652 = vmatpush1.msra.mxu0 %v254
  %653 = vmatprep.subr.mxu0 0.0
  %654 = vmatpush1.msra.mxu0 %v251
  %655 = vmatprep.subr.mxu0 0.0
  %656 = vmatpush1.msra.mxu0 %v248
  %657 = vmatprep.subr.mxu0 0.0
  %658 = vmatpush1.msra.mxu0 %v245
  %659 = vmatprep.subr.mxu0 0.0
  %660 = vmatpush1.msra.mxu0 %v242
  %661 = vmatprep.subr.mxu0 0.0
  %662 = vmatpush1.msra.mxu0 %v239
  %663 = vmatprep.subr.mxu0 0.0
  %664 = vmatpush1.msra.mxu0 %v236
  %665 = vmatprep.subr.mxu0 0.0
  %666 = vmatpush1.msra.mxu0 %v233
  %667 = vmatprep.subr.mxu0 0.0
  %668 = vmatpush1.msra.mxu0 %v230
  %669 = vmatprep.subr.mxu0 0.0
  %670 = vmatpush1.msra.mxu0 %v227
  %671 = vmatprep.subr.mxu0 0.0
  %672 = vmatpush1.msra.mxu0 %v224
  %673 = vmatprep.subr.mxu0 0.0
  %674 = vmatpush1.msra.mxu0 %v221
  %675 = vmatprep.subr.mxu0 0.0
  %676 = vmatpush1.msra.mxu0 %v218
  %677 = vmatprep.subr.mxu0 0.0
  %678 = vmatpush1.msra.mxu0 %v215
  %679 = vmatprep.subr.mxu0 0.0
  %680 = vmatpush1.msra.mxu0 %v212
  %681 = vmatprep.subr.mxu0 0.0
  %682 = vmatpush1.msra.mxu0 %v209
  %683 = vmatprep.subr.mxu0 0.0
  %684 = vmatpush2.msra.mxu0 0.0
  %685 = vmatprep.subr.mxu0 0.0
  %686 = vmatpush2.msra.mxu0 0.0
  %687 = vmatprep.subr.mxu0 0.0
  %688 = vmatpush2.msra.mxu0 0.0
  %689 = vmatprep.subr.mxu0 0.0
  %690 = vmatpush2.msra.mxu0 0.0
  %691 = vmatprep.subr.mxu0 0.0
  %692 = vmatpush2.msra.mxu0 0.0
  %693 = vmatprep.subr.mxu0 0.0
  %694 = vmatpush2.msra.mxu0 0.0
  %695 = vmatprep.subr.mxu0 0.0
  %696 = vmatpush2.msra.mxu0 0.0
  %697 = vmatprep.subr.mxu0 0.0
  %698 = vmatpush2.msra.mxu0 0.0
  %699 = vmatprep.subr.mxu0 0.0
  %700 = vmatpush2.msra.mxu0 0.0
  %701 = vmatprep.subr.mxu0 0.0
  %702 = vmatpush2.msra.mxu0 0.0
  %703 = vmatprep.subr.mxu0 0.0
  %704 = vmatpush2.msra.mxu0 0.0
  %705 = vmatprep.subr.mxu0 0.0
  %706 = vmatpush2.msra.mxu0 0.0
  %707 = vmatprep.subr.mxu0 0.0
  %708 = vmatpush2.msra.mxu0 0.0
  %709 = vmatprep.subr.mxu0 0.0
  %710 = vmatpush2.msra.mxu0 0.0
  %711 = vmatprep.subr.mxu0 0.0
  %712 = vmatpush2.msra.mxu0 0.0
  %713 = vmatprep.subr.mxu0 0.0
  %714 = vmatpush2.msra.mxu0 0.0
  %715 = vmatprep.mubr.f32.mxu0 0.0
  %716 = vmatmul.mubr.f32.gmra.mxu0 %v276
  %v717 = vpop.f32.mrf.mxu0
  %v718 = vadd.f32 %v648, %v717
  %v719 = vpop.f32.mrf.mxu0
  %720 = vdwg.mxu0
  %v724 = vcombine.low %v507, %v509
  %v726 = vunpack.c.l.s4 1966171168
  %v727 = vunpack.c.0.s8 %v726
  %v728 = vlaneseq
  %v729 = vshrl.u32 %v728, 7
  %v730 = vsub.s32 %v727, %v729
  %v731 = vrot.slane %v724, %v730
  %v733 = vunpack.c.l.s4 1966171168
  %v734 = vunpack.c.0.s8 %v733
  %v735 = vlaneseq
  %v736 = vshrl.u32 %v735, 7
  %v737 = vsub.s32 %v734, %v736
  %v738 = vrot.slane %v718, %v737
  %v739 = vcombine.low %v731, %v738
  %v741 = vunpack.c.l.s4 1966171168
  %v742 = vunpack.c.0.s8 %v741
  %v743 = vlaneseq
  %v744 = vshrl.u32 %v743, 7
  %v745 = vsub.s32 %v742, %v744
  %v746 = vrot.slane %v739, %v745
  %v748 = vlaneseq
  %vm749 = vcmp.ge.s32.totalorder %v748, 0
  %vm750 = vcmp.lt.s32.totalorder %v748, 320
  %vm751 = vmand %vm749, %vm750
  %752 = vst.msk [vmem:[%s3] sm:$0x7] %vm751, %v746
  // Predicated region
  $region14: #{linear_forward.1} parent=0 // pred_check
    _
  $region15: #{linear_forward.1} parent=0 // pred_check_branch
    %754 = sbr.rel (0) target = $region17
  $region16: #{linear_forward.1} parent=0 // pred_region
    _
  $region17: #{linear_forward.1} parent=0 // pred_fallthru
    _
  // Predicated region
  $region18: #{linear_forward.1} parent=0 // pred_check
    _
  $region19: #{linear_forward.1} parent=0 // pred_check_branch
    %756 = sbr.rel (0) target = $region21
  $region20: #{linear_forward.1} parent=0 // pred_region
    _
  $region21: #{linear_forward.1} parent=0 // pred_fallthru
    _

</llo_original>
